<compile_context>
chip_gen: v7x
topology: tpu7x:2x2x1
jax: 0.10.0
libtpu: 0.0.40
codegen_flags: <defaults>
</compile_context>

<pallas_src>
import jax
import jax.numpy as jnp
from jax.experimental import pallas as pl
from jax.experimental.pallas import tpu as pltpu

# ----------------------------- config --------------------------------------
BATCH = 2
SEQ = 8
HIDDEN = 32
VOCAB = 50
INIT_RANGE = 0.02
LN_EPS = 1e-5

DEFAULT_ROW_TILE = 1024   # target rows per grid step at realistic B*S
PARAM_ROWS = 8            # packed-parameter block rows (f32 sublane tile)


def _round_up(n, m):
    return (n + m - 1) // m * m


def _cdiv(a, b):
    return (a + b - 1) // b


def _select_row_tile(rows, target=DEFAULT_ROW_TILE):
    """Pick a row tile <= target such that padding stays minimal and the grid
    keeps >=2 steps for non-tiny inputs (v7x megacore sharding)."""
    min_steps = 2 if rows >= 256 else 1
    n_steps = max(min_steps, _cdiv(rows, target))
    row_tile = _round_up(_cdiv(rows, n_steps), 8)
    return row_tile, n_steps * row_tile


# --------------------------- Pallas kernel ----------------------------------
def ln_qa_kernel(x_ref, p_ref, out_ref):
    """Fused BertLayerNorm (TF-style, eps inside sqrt) + qa_outputs head,
    with the LayerNorm affine and qa bias folded into the projection.

    x_ref:   (row_tile, H)  bf16/f32 hidden-state tile (upcast to f32 here)
    p_ref:   (8, H)         packed f32 params:
                              row 0: c_start = ln_w * qa_w[:, 0]
                              row 1: c_end   = ln_w * qa_w[:, 1]
                              row 2, cols 0/1: const_start / const_end
                              row 3, cols 0/1: csum_start  / csum_end
                              rows 4-7: unused (sublane-tile padding)
    out_ref: (row_tile, 2)  f32; column 0 = start logit, column 1 = end logit
    """
    x = x_ref[...].astype(jnp.float32)          # (T, H), f32 compute
    c_start = p_ref[0:1, :]                     # (1, H)
    c_end = p_ref[1:2, :]                       # (1, H)
    const_s = p_ref[2:3, 0:1]                   # (1, 1) scalars, added post-reduction
    const_e = p_ref[2:3, 1:2]
    csum_s = p_ref[3:4, 0:1]
    csum_e = p_ref[3:4, 1:2]

    inv_h = 1.0 / x.shape[-1]

    # Four lane (XLU) reductions over x; only 3 full (T, H) VPU multiplies.
    sum_x = jnp.sum(x, axis=-1, keepdims=True)              # (T, 1)
    sum_xx = jnp.sum(x * x, axis=-1, keepdims=True)         # (T, 1)
    r_s = jnp.sum(x * c_start, axis=-1, keepdims=True)      # (T, 1)
    r_e = jnp.sum(x * c_end, axis=-1, keepdims=True)        # (T, 1)

    u = sum_x * inv_h
    var = sum_xx * inv_h - u * u                 # E[x^2] - u^2
    rinv = jax.lax.rsqrt(var + LN_EPS)           # (T, 1)

    out_ref[:, 0:1] = rinv * (r_s - u * csum_s) + const_s
    out_ref[:, 1:2] = rinv * (r_e - u * csum_e) + const_e


def roberta_joint_long_head(hidden_states, ln_w, ln_b, qa_w, qa_b,
                            *, row_tile=None):
    """hidden_states: (B, S, H) -> (start_logits, end_logits), each (B, S)."""
    B, S, H = hidden_states.shape
    rows = B * S

    if row_tile is None:
        row_tile, rows_p = _select_row_tile(rows)
    else:
        row_tile = _round_up(row_tile, 8)
        rows_p = _round_up(rows, row_tile)

    # Activations are streamed in whatever dtype the producer emitted
    # (ideally bf16 from the encoder epilogue); the kernel upcasts to f32.
    x2d = hidden_states.reshape(rows, H)
    if rows_p != rows:
        # TODO(synk): for large inputs, prefer producer-side padding (or shapes
        #             that divide the tile) to avoid this extra copy pass.
        x2d = jnp.pad(x2d, ((0, rows_p - rows), (0, 0)))

    # Fold LayerNorm affine + qa bias into the projection (tiny, one-time).
    ln_w = ln_w.astype(jnp.float32)
    ln_b = ln_b.astype(jnp.float32)
    qa_w = qa_w.astype(jnp.float32)
    qa_b = qa_b.astype(jnp.float32)
    c = ln_w[:, None] * qa_w                     # (H, 2)
    const = ln_b @ qa_w + qa_b                   # (2,)
    csum = jnp.sum(c, axis=0)                    # (2,)

    params = jnp.zeros((PARAM_ROWS, H), jnp.float32)
    params = params.at[0].set(c[:, 0])
    params = params.at[1].set(c[:, 1])
    params = params.at[2, 0].set(const[0])
    params = params.at[2, 1].set(const[1])
    params = params.at[3, 0].set(csum[0])
    params = params.at[3, 1].set(csum[1])

    grid = (rows_p // row_tile,)
    out = pl.pallas_call(
        ln_qa_kernel,
        out_shape=jax.ShapeDtypeStruct((rows_p, 2), jnp.float32),
        grid_spec=pltpu.PrefetchScalarGridSpec(
            num_scalar_prefetch=0,
            grid=grid,
            in_specs=[
                pl.BlockSpec((row_tile, H), lambda i: (i, 0)),       # x tile
                pl.BlockSpec((PARAM_ROWS, H), lambda i: (0, 0)),     # packed params
            ],
            out_specs=pl.BlockSpec((row_tile, 2), lambda i: (i, 0)),
        ),
        compiler_params=pltpu.CompilerParams(
            dimension_semantics=("parallel",),
            # Covers 1024-row tiles at H=1024 on v5e (16 MiB default scope);
            # matches the v6e/v7x defaults, so no over-ask on v7x's 64 MiB VMEM.
            vmem_limit_bytes=32 * 1024 * 1024,
        ),
    )(x2d, params)

    logits = out[:rows].reshape(B, S, 2)
    start_logits = logits[..., 0]    # squeeze(-1) of split(1, dim=-1)
    end_logits = logits[..., 1]
    return start_logits, end_logits


# ------------------------- parameter init (deterministic) -------------------
def init_params(key):
    k_emb, k_lnw, k_lnb, k_qa = jax.random.split(key, 4)
    # nn.Embedding.weight ~ N(0, initializer_range)
    emb = INIT_RANGE * jax.random.normal(k_emb, (VOCAB, HIDDEN), jnp.float32)
    # init_bert_weights: BertLayerNorm weight/bias ~ N(0, initializer_range)
    ln_w = INIT_RANGE * jax.random.normal(k_lnw, (HIDDEN,), jnp.float32)
    ln_b = INIT_RANGE * jax.random.normal(k_lnb, (HIDDEN,), jnp.float32)
    # qa_outputs: weight ~ N(0, initializer_range), bias = 0
    qa_w = INIT_RANGE * jax.random.normal(k_qa, (HIDDEN, 2), jnp.float32)
    qa_b = jnp.zeros((2,), jnp.float32)
    return emb, ln_w, ln_b, qa_w, qa_b


def forward(input_ids, params):
    """Inference path of RobertaJointForLong.forward (no positions given)."""
    emb, ln_w, ln_b, qa_w, qa_b = params
    # Stub `bert` encoder: bf16 embedding lookup, so activations are born bf16
    # (halves kernel HBM reads; no separate full-activation cast pass).
    sequence_output = jnp.take(emb.astype(jnp.bfloat16), input_ids, axis=0)  # (B, S, H)
    # TODO(synk): the external multi-layer `bert` encoder is an injected
    #             dependency, not part of this module; stubbed as an embedding
    #             lookup, so the gather stays in the wrapper.
    # TODO(synk): training branch (CrossEntropyLoss on start/end positions)
    #             not implemented; inference path only.
    return roberta_joint_long_head(sequence_output, ln_w, ln_b, qa_w, qa_b)


# --------------------------------- main --------------------------------------
if __name__ == "__main__":
    key = jax.random.PRNGKey(0)
    k_ids, k_params = jax.random.split(key)
    input_ids = jax.random.randint(k_ids, (BATCH, SEQ), 0, VOCAB, jnp.int32)
    params = init_params(k_params)

    start_logits, end_logits = forward(input_ids, params)
    jax.block_until_ready((start_logits, end_logits))

    # Reference in plain JAX, same bf16-cast activations as the kernel path.
    # (Inference-grade: bf16 activation streaming makes results differ slightly
    # from an all-f32 PyTorch reference.)
    emb, ln_w, ln_b, qa_w, qa_b = params
    x = jnp.take(emb.astype(jnp.bfloat16), input_ids, axis=0).astype(jnp.float32)
    u = x.mean(-1, keepdims=True)
    s = ((x - u) ** 2).mean(-1, keepdims=True)
    h = ln_w * ((x - u) * jax.lax.rsqrt(s + LN_EPS)) + ln_b
    ref = h @ qa_w + qa_b

    assert start_logits.shape == (BATCH, SEQ) and end_logits.shape == (BATCH, SEQ)
    assert jnp.allclose(start_logits, ref[..., 0], atol=2e-5)
    assert jnp.allclose(end_logits, ref[..., 1], atol=2e-5)

    print("KERNEL_OK")
</pallas_src>

<mosaic_0001>
module attributes {stable_mosaic.version = 11 : i64} {
  func.func @ln_qa_kernel(%arg0: i32, %arg1: memref<16x32xbf16, #tpu.memory_space<vmem>>, %arg2: memref<8x32xf32, #tpu.memory_space<vmem>>, %arg3: memref<16x2xf32, #tpu.memory_space<vmem>>) attributes {dimension_semantics = [#tpu.dimension_semantics<parallel>], iteration_bounds = array<i64: 1>, scalar_prefetch = 0 : i64, scratch_operands = 0 : i64, tpu.core_type = #tpu.core_type<tc>, window_params = [{transform_indices = @transform_0, window_bounds = array<i64: 16, 32>}, {pipeline_mode = #tpu.pipeline_mode<synchronous>, transform_indices = @transform_1, window_bounds = array<i64: 8, 32>}, {transform_indices = @transform_2, window_bounds = array<i64: 16, 2>}]} {
    %c0 = arith.constant 0 : index
    %c0_0 = arith.constant 0 : index
    %0 = vector.load %arg1[%c0, %c0_0] : memref<16x32xbf16, #tpu.memory_space<vmem>>, vector<16x32xbf16>
    %1 = arith.extf %0 : vector<16x32xbf16> to vector<16x32xf32>
    %c0_1 = arith.constant 0 : index
    %c0_2 = arith.constant 0 : index
    %2 = vector.load %arg2[%c0_1, %c0_2] : memref<8x32xf32, #tpu.memory_space<vmem>>, vector<1x32xf32>
    %c1 = arith.constant 1 : index
    %c0_3 = arith.constant 0 : index
    %3 = vector.load %arg2[%c1, %c0_3] : memref<8x32xf32, #tpu.memory_space<vmem>>, vector<1x32xf32>
    %c2 = arith.constant 2 : index
    %c0_4 = arith.constant 0 : index
    %4 = vector.load %arg2[%c2, %c0_4] : memref<8x32xf32, #tpu.memory_space<vmem>>, vector<1x1xf32>
    %c2_5 = arith.constant 2 : index
    %c1_6 = arith.constant 1 : index
    %5 = vector.load %arg2[%c2_5, %c1_6] : memref<8x32xf32, #tpu.memory_space<vmem>>, vector<1x1xf32>
    %c3 = arith.constant 3 : index
    %c0_7 = arith.constant 0 : index
    %6 = vector.load %arg2[%c3, %c0_7] : memref<8x32xf32, #tpu.memory_space<vmem>>, vector<1x1xf32>
    %c3_8 = arith.constant 3 : index
    %c1_9 = arith.constant 1 : index
    %7 = vector.load %arg2[%c3_8, %c1_9] : memref<8x32xf32, #tpu.memory_space<vmem>>, vector<1x1xf32>
    %cst = arith.constant dense<0.000000e+00> : vector<16xf32>
    %8 = vector.multi_reduction <add>, %1, %cst [1] : vector<16x32xf32> to vector<16xf32>
    %9 = vector.shape_cast %8 : vector<16xf32> to vector<16x1xf32>
    %10 = arith.mulf %1, %1 : vector<16x32xf32>
    %cst_10 = arith.constant dense<0.000000e+00> : vector<16xf32>
    %11 = vector.multi_reduction <add>, %10, %cst_10 [1] : vector<16x32xf32> to vector<16xf32>
    %12 = vector.shape_cast %11 : vector<16xf32> to vector<16x1xf32>
    %13 = vector.broadcast %2 : vector<1x32xf32> to vector<16x32xf32>
    %14 = arith.mulf %1, %13 : vector<16x32xf32>
    %cst_11 = arith.constant dense<0.000000e+00> : vector<16xf32>
    %15 = vector.multi_reduction <add>, %14, %cst_11 [1] : vector<16x32xf32> to vector<16xf32>
    %16 = vector.shape_cast %15 : vector<16xf32> to vector<16x1xf32>
    %17 = vector.broadcast %3 : vector<1x32xf32> to vector<16x32xf32>
    %18 = arith.mulf %1, %17 : vector<16x32xf32>
    %cst_12 = arith.constant dense<0.000000e+00> : vector<16xf32>
    %19 = vector.multi_reduction <add>, %18, %cst_12 [1] : vector<16x32xf32> to vector<16xf32>
    %20 = vector.shape_cast %19 : vector<16xf32> to vector<16x1xf32>
    %cst_13 = arith.constant 3.125000e-02 : f32
    %21 = vector.broadcast %cst_13 : f32 to vector<16x1xf32>
    %22 = arith.mulf %9, %21 : vector<16x1xf32>
    %cst_14 = arith.constant 3.125000e-02 : f32
    %23 = vector.broadcast %cst_14 : f32 to vector<16x1xf32>
    %24 = arith.mulf %12, %23 : vector<16x1xf32>
    %25 = arith.mulf %22, %22 : vector<16x1xf32>
    %26 = arith.subf %24, %25 : vector<16x1xf32>
    %cst_15 = arith.constant 9.99999974E-6 : f32
    %27 = vector.broadcast %cst_15 : f32 to vector<16x1xf32>
    %28 = arith.addf %26, %27 : vector<16x1xf32>
    %29 = math.rsqrt %28 : vector<16x1xf32>
    %30 = vector.broadcast %6 : vector<1x1xf32> to vector<16x1xf32>
    %31 = arith.mulf %22, %30 : vector<16x1xf32>
    %32 = arith.subf %16, %31 : vector<16x1xf32>
    %33 = arith.mulf %29, %32 : vector<16x1xf32>
    %34 = vector.broadcast %4 : vector<1x1xf32> to vector<16x1xf32>
    %35 = arith.addf %33, %34 : vector<16x1xf32>
    %c0_16 = arith.constant 0 : index
    %c0_17 = arith.constant 0 : index
    %36 = vector.load %arg3[%c0_16, %c0_17] : memref<16x2xf32, #tpu.memory_space<vmem>>, vector<16x1xf32>
    tpu.vector_store %arg3[%c0_16, %c0_17], %35 {strides = array<i32>} : memref<16x2xf32, #tpu.memory_space<vmem>>, vector<16x1xf32>,
    %37 = vector.broadcast %7 : vector<1x1xf32> to vector<16x1xf32>
    %38 = arith.mulf %22, %37 : vector<16x1xf32>
    %39 = arith.subf %20, %38 : vector<16x1xf32>
    %40 = arith.mulf %29, %39 : vector<16x1xf32>
    %41 = vector.broadcast %5 : vector<1x1xf32> to vector<16x1xf32>
    %42 = arith.addf %40, %41 : vector<16x1xf32>
    %c0_18 = arith.constant 0 : index
    %c1_19 = arith.constant 1 : index
    %43 = vector.load %arg3[%c0_18, %c1_19] : memref<16x2xf32, #tpu.memory_space<vmem>>, vector<16x1xf32>
    tpu.vector_store %arg3[%c0_18, %c1_19], %42 {strides = array<i32>} : memref<16x2xf32, #tpu.memory_space<vmem>>, vector<16x1xf32>,
    return
  }
  func.func @transform_0(%arg0: i32) -> (i32, i32) {
    %c0_i32 = arith.constant 0 : i32
    %c0_i32_0 = arith.constant 0 : i32
    return %arg0, %c0_i32 : i32, i32
  }
  func.func @transform_1(%arg0: i32) -> (i32, i32) {
    %c0_i32 = arith.constant 0 : i32
    %c0_i32_0 = arith.constant 0 : i32
    %c0_i32_1 = arith.constant 0 : i32
    return %c0_i32, %c0_i32_0 : i32, i32
  }
  func.func @transform_2(%arg0: i32) -> (i32, i32) {
    %c0_i32 = arith.constant 0 : i32
    %c0_i32_0 = arith.constant 0 : i32
    return %arg0, %c0_i32 : i32, i32
  }
}

</mosaic_0001>

<llo_original>
// kernel: tpu_custom_call.1
$region0: #{tpu_custom_call.1}
  #allocation0 [shape = 'u32[]', space=smem, size = 0x4, offset = 0x4, fixed_abs, tag = 'smem constant byte address 0x4 - core index']
  #allocation1 [shape = 'u32[144,128]{1,0:T(1,128)}', space=vmem, size = 0x12000, scoped, tag = 'internal scratch']
  %s0 = inlined_call_operand.hbm [shape: bf16[16,32], index: 0, kind: input, shape index: {}]
  %s1 = inlined_call_operand.hbm [shape: f32[8,32], index: 1, kind: input, shape index: {}]
  %s2 = inlined_call_operand.vmem [shape: f32[16,2], index: 2, kind: output, shape index: {}]
  %s3 = sld [smem:[#allocation0]]
  $region26: #{tpu_custom_call.1} parent=0
    _
  %s5 = ssub.s32 1, %s3
  %s6 = scalar_select 0, %s5, %s3
  $region1: #{tpu_custom_call.1} parent=0
    #allocation2 [shape = 'u8[4096]{0}', space=vmem, size = 0x1000, scoped, tag = 'input window, operand 0, single buffered']
    #allocation3 [shape = 's32[1]{0}', space=sflag, size = 0x4, scoped, tag = 'scoped memory for tpu_custom_call.1']
    #allocation4 [shape = 'u8[4096]{0}', space=vmem, size = 0x1000, scoped, tag = 'input window, operand 1, single buffered']
    #allocation5 [shape = 's32[1]{0}', space=sflag, size = 0x4, scoped, tag = 'scoped memory for tpu_custom_call.1']
    %7 = vsyncpa [#allocation3], 0
    %8 = vsyncpa [#allocation5], 0
    // Predicated region
    $region2: #{tpu_custom_call.1} parent=1 // pred_check
      _
    $region3: #{tpu_custom_call.1} parent=1 // pred_check_branch
      %10 = sbr.rel (0) target = $region5
    $region4: #{tpu_custom_call.1} parent=1 // pred_region
      %s12 = ssub.s32 128, 128
      %13 = vsyncadd [#allocation3], %s12
      %s14 = sshll.u32 [#allocation2], 4
      %s15 = int_to_ptr.vmem [resolvable:$true] %s14
      %20 = dma.hbm_to_vmem [thread:$0]  %s0, 128, %s15, [#allocation3], 64, 64, 4
    $region5: #{tpu_custom_call.1} parent=1 // pred_fallthru
      _
    // Predicated region
    $region6: #{tpu_custom_call.1} parent=1 // pred_check
      _
    $region7: #{tpu_custom_call.1} parent=1 // pred_check_branch
      %22 = sbr.rel (0) target = $region9
    $region8: #{tpu_custom_call.1} parent=1 // pred_region
      %s24 = ssub.s32 128, 128
      %25 = vsyncadd [#allocation5], %s24
      %s27 = sshll.u32 [#allocation4], 4
      %s28 = int_to_ptr.vmem [resolvable:$true] %s27
      %30 = dma.hbm_to_vmem [thread:$0]  %s1, 128, %s28, [#allocation5]
    $region9: #{tpu_custom_call.1} parent=1 // pred_fallthru
      _
    // Predicated region
    $region10: #{tpu_custom_call.1} parent=1 // pred_check
      _
    $region11: #{tpu_custom_call.1} parent=1 // pred_check_branch
      %32 = sbr.rel (0) target = $region13
    $region12: #{tpu_custom_call.1} parent=1 // pred_region
      %33 = dma.done [#allocation3], 128
    $region13: #{tpu_custom_call.1} parent=1 // pred_fallthru
      _
    // Predicated region
    $region14: #{tpu_custom_call.1} parent=1 // pred_check
      _
    $region15: #{tpu_custom_call.1} parent=1 // pred_check_branch
      %35 = sbr.rel (0) target = $region17
    $region16: #{tpu_custom_call.1} parent=1 // pred_region
      %36 = dma.done [#allocation5], 128
    $region17: #{tpu_custom_call.1} parent=1 // pred_fallthru
      _
    %v37 = vld [vmem:[#allocation2] sm:$0xf]
    %v38 = vld [vmem:[#allocation2 + $0x4] sm:$0xf]
    %v39 = vunpack.c.l.bf16 %v37
    %v40 = vunpack.c.l.bf16 %v38
    %v41 = vld [vmem:[#allocation4] sm:$0x1]
    %v42 = vld [vmem:[#allocation4 + $0x1] sm:$0x1]
    %v43 = vld [vmem:[#allocation4 + $0x2] sm:$0x1]
    %v44 = vld [vmem:[#allocation4 + $0x3] sm:$0x1]
    %vm45 = vcmask 261120
    %v46 = vsel %vm45, %v39, 0.0
    %47 = vadd.xlane.f32.xlu0 %v46
    %v48 = vpop.xlane.xlu0 %47
    %v49 = vsel %vm45, %v40, 0.0
    %50 = vadd.xlane.f32.xlu0 %v49
    %v51 = vpop.xlane.xlu0 %50
    %v52 = vmul.f32 %v39, %v39
    %v53 = vmul.f32 %v40, %v40
    %v54 = vsel %vm45, %v52, 0.0
    %55 = vadd.xlane.f32.xlu0 %v54
    %v56 = vpop.xlane.xlu0 %55
    %v57 = vsel %vm45, %v53, 0.0
    %58 = vadd.xlane.f32.xlu0 %v57
    %v59 = vpop.xlane.xlu0 %58
    %v60 = vlaneseq
    %v61 = vshrl.u32 %v60, 7
    %v62 = vsub.s32 0, %v61
    %v63 = vrot.slane %v41, %v62
    %v64 = vmul.f32 %v39, %v63
    %v65 = vmul.f32 %v40, %v63
    %v66 = vsel %vm45, %v64, 0.0
    %67 = vadd.xlane.f32.xlu0 %v66
    %v68 = vpop.xlane.xlu0 %67
    %v69 = vsel %vm45, %v65, 0.0
    %70 = vadd.xlane.f32.xlu0 %v69
    %v71 = vpop.xlane.xlu0 %70
    %v72 = vlaneseq
    %v73 = vshrl.u32 %v72, 7
    %v74 = vsub.s32 0, %v73
    %v75 = vrot.slane %v42, %v74
    %v76 = vmul.f32 %v39, %v75
    %v77 = vmul.f32 %v40, %v75
    %v78 = vsel %vm45, %v76, 0.0
    %79 = vadd.xlane.f32.xlu0 %v78
    %v80 = vpop.xlane.xlu0 %79
    %v81 = vsel %vm45, %v77, 0.0
    %82 = vadd.xlane.f32.xlu0 %v81
    %v83 = vpop.xlane.xlu0 %82
    %v84 = vmul.f32 %v48, 0.03125
    %v85 = vmul.f32 %v51, 0.03125
    %v86 = vmul.f32 %v56, 0.03125
    %v87 = vmul.f32 %v59, 0.03125
    %v88 = vmul.f32 %v84, %v84
    %v89 = vmul.f32 %v85, %v85
    %v90 = vsub.f32 %v86, %v88
    %v91 = vsub.f32 %v87, %v89
    %v92 = vadd.f32 %v90, 1e-05
    %v93 = vadd.f32 %v91, 1e-05
    %v94 = vrsqrt.pop %v92
    %v95 = vrsqrt.pop %v93
    %v96 = vlaneseq
    %v97 = vshrl.u32 %v96, 7
    %v98 = vsub.s32 0, %v97
    %v99 = vrot.slane %v44, %v98
    %v100 = vmul.f32 %v84, %v99
    %v101 = vmul.f32 %v85, %v99
    %v102 = vsub.f32 %v68, %v100
    %v103 = vsub.f32 %v71, %v101
    %v104 = vmul.f32 %v94, %v102
    %v105 = vmul.f32 %v95, %v103
    %v106 = vlaneseq
    %v107 = vshrl.u32 %v106, 7
    %v108 = vsub.s32 0, %v107
    %v109 = vrot.slane %v43, %v108
    %v110 = vadd.f32 %v104, %v109
    %v111 = vadd.f32 %v105, %v109
    %vm112 = vcmask 7168
    %113 = vst.msk [vmem:[%s2] sm:$0xff] %vm112, %v110
    %114 = vst.msk [vmem:[%s2 + $0x8] sm:$0xff] %vm112, %v111
    %v115 = vsub.f32 %v80, %v100
    %v116 = vsub.f32 %v83, %v101
    %v117 = vmul.f32 %v94, %v115
    %v118 = vmul.f32 %v95, %v116
    %v119 = vadd.f32 %v117, %v109
    %v120 = vadd.f32 %v118, %v109
    %vm121 = vcmask 15368
    %122 = vst.msk [vmem:[%s2] sm:$0xff] %vm121, %v119
    %123 = vst.msk [vmem:[%s2 + $0x8] sm:$0xff] %vm121, %v120
    // Predicated region
    $region18: #{tpu_custom_call.1} parent=1 // pred_check
      _
    $region19: #{tpu_custom_call.1} parent=1 // pred_check_branch
      %125 = sbr.rel (0) target = $region21
    $region20: #{tpu_custom_call.1} parent=1 // pred_region
      _
    $region21: #{tpu_custom_call.1} parent=1 // pred_fallthru
      _
    // Predicated region
    $region22: #{tpu_custom_call.1} parent=1 // pred_check
      _
    $region23: #{tpu_custom_call.1} parent=1 // pred_check_branch
      %127 = sbr.rel (0) target = $region25
    $region24: #{tpu_custom_call.1} parent=1 // pred_region
      _
    $region25: #{tpu_custom_call.1} parent=1 // pred_fallthru
      _
    %128 = vsyncpa [#allocation3], 1
    %129 = vsyncpa [#allocation5], 1

</llo_original>
